<compile_context>
chip_gen: v5e
topology: v5e:2x2
jax: 0.10.0
libtpu: 0.0.40
codegen_flags: <defaults>
</compile_context>

<pallas_src>
import math

import jax
import jax.numpy as jnp
from jax import lax
from jax.experimental import pallas as pl
from jax.experimental.pallas import tpu as pltpu


def _round_up(x, m):
    return (x + m - 1) // m * m


def _erf(x):
    # Abramowitz & Stegun 7.1.26 polynomial approximation (|err| ~1.5e-7).
    a1, a2, a3, a4, a5 = (0.254829592, -0.284496736, 1.421413741,
                          -1.453152027, 1.061405429)
    p = 0.3275911
    s = jnp.where(x >= 0.0, 1.0, -1.0)
    ax = x * s
    t = 1.0 / (1.0 + p * ax)
    poly = ((((a5 * t + a4) * t + a3) * t + a2) * t + a1) * t
    return s * (1.0 - poly * jnp.exp(-ax * ax))


def _gelu_exact(x):
    # PyTorch nn.GELU() default: exact erf formulation.
    return 0.5 * x * (1.0 + _erf(x * (1.0 / math.sqrt(2.0))))


# ------------- pass 1: conv matmul (bf16 MXU) + per-tile BN partial sums -------------
def _conv_stats_kernel(lhs_ref, rhs_ref, stat_ref):
    # lhs_ref : (TM, K)    bf16 im2col rows for this tile
    # rhs_ref : (K, Cp)    bf16 weights, zero-padded to Cp lanes (resident)
    # stat_ref: (1, 2, Cp) per-tile [sum; sum_of_squares] over rows (f32)
    y = jnp.dot(lhs_ref[...], rhs_ref[...], preferred_element_type=jnp.float32)
    stat_ref[0, 0:1, :] = jnp.sum(y, axis=0, keepdims=True)        # two direct stores,
    stat_ref[0, 1:2, :] = jnp.sum(y * y, axis=0, keepdims=True)    # no concat/relayout


# ------------- pass 2: recompute conv tile + fused BN affine + GELU -------------
def _conv_bn_gelu_kernel(lhs_ref, rhs_ref, scale_ref, shift_ref, o_ref):
    # Recomputing the matmul from the bf16 im2col rows is fewer HBM bytes than
    # round-tripping an f32 conv intermediate when K << (padded) C_out.
    y = jnp.dot(lhs_ref[...], rhs_ref[...], preferred_element_type=jnp.float32)
    z = y * scale_ref[...] + shift_ref[...]
    g = _gelu_exact(z)
    c_out = o_ref.shape[-1]
    o_ref[...] = g[:, :c_out].astype(o_ref.dtype)   # unpadded channel store


def _pick_tile_m(M, K, c_out, cp, requested):
    # Double-buffered bf16 lhs blocks + double-buffered output blocks + a few
    # f32 (tm, Cp) in-kernel temporaries; keep the working set ~<= 20 MiB so the
    # same tiling is safe on v7x (64 MiB phys / 32 MiB scoped) and leaves
    # v5e/v6e VMEM free for deeper pipelining.
    per_row = 2 * (K * 2) + 2 * (c_out * 4) + 4 * (cp * 4)
    cap = max(16, (20 * 1024 * 1024 // per_row) // 16 * 16)
    tm = min(requested, cap)
    # Keep >= ~8 grid steps when M allows, so both v7x TensorCores get work
    # under dimension_semantics=("parallel",) and the pipeline has slack.
    tm = min(tm, max(16, _round_up(pl.cdiv(M, 8), 16)))
    return _round_up(max(tm, 16), 16)


def conv_bn_gelu(x_nchw, weight_oihw, gamma, beta, *, stride, padding, dilation,
                 eps=1e-5, tile_m=512):
    """ConvBNReLU forward. x_nchw: (N, C_in, H, W), weight: (C_out, C_in, KH, KW)."""
    N, C_in, H, W = x_nchw.shape
    C_out, _, KH, KW = weight_oihw.shape
    H_out = (H + 2 * padding - dilation * (KH - 1) - 1) // stride + 1
    W_out = (W + 2 * padding - dilation * (KW - 1) - 1) // stride + 1

    K = KH * KW * C_in
    Cp = _round_up(C_out, 128)          # lane-dense width for the tiny resident tensors
    M = N * H_out * W_out               # flattened output pixels

    # ---- wrapper glue: im2col (K ordered as (kh, kw, c_in)), bf16 MXU operands ----
    x_nhwc = jnp.transpose(x_nchw, (0, 2, 3, 1)).astype(jnp.float32)
    x_pad = jnp.pad(x_nhwc, ((0, 0), (padding, padding), (padding, padding), (0, 0)))
    cols = []
    for kh in range(KH):
        for kw in range(KW):
            h0 = kh * dilation
            w0 = kw * dilation
            cols.append(x_pad[:, h0:h0 + (H_out - 1) * stride + 1:stride,
                              w0:w0 + (W_out - 1) * stride + 1:stride, :])
    lhs = jnp.concatenate(cols, axis=-1).reshape(M, K).astype(jnp.bfloat16)

    # Weights: OIHW -> (kh, kw, c_in, c_out) -> (K, Cp) with zero lane padding (tiny).
    w_mat = jnp.transpose(weight_oihw, (2, 3, 1, 0)).reshape(K, C_out)
    w_mat = jnp.pad(w_mat, ((0, 0), (0, Cp - C_out))).astype(jnp.bfloat16)

    tm = _pick_tile_m(M, K, C_out, Cp, tile_m)
    M_pad = _round_up(M, tm)
    grid_m = M_pad // tm
    lhs = jnp.pad(lhs, ((0, M_pad - M), (0, 0)))   # zero rows contribute 0 to the sums

    cparams = pltpu.CompilerParams(
        dimension_semantics=("parallel",),
        vmem_limit_bytes=32 * 1024 * 1024,   # working set sized well below this
    )

    # ---- pass 1: conv + partial BN stats (no conv intermediate leaves the chip) ----
    part = pl.pallas_call(
        _conv_stats_kernel,
        grid=(grid_m,),
        in_specs=[
            pl.BlockSpec((tm, K), lambda i: (i, 0)),
            pl.BlockSpec((K, Cp), lambda i: (0, 0)),
        ],
        out_specs=pl.BlockSpec((1, 2, Cp), lambda i: (i, 0, 0)),
        out_shape=jax.ShapeDtypeStruct((grid_m, 2, Cp), jnp.float32),
        compiler_params=cparams,
    )(lhs, w_mat)

    # ---- tiny cross-tile reduction + fold the BN affine (per-channel, in JAX) ----
    sums = jnp.sum(part, axis=0)                      # (2, Cp)
    s1 = sums[0, :C_out]
    s2 = sums[1, :C_out]
    count = jnp.float32(M)                            # true count (no padded rows)
    mean = s1 / count
    var = jnp.maximum(s2 / count - mean * mean, 0.0)  # biased variance
    scale = gamma.astype(jnp.float32) * lax.rsqrt(var + eps)
    shift = beta.astype(jnp.float32) - mean * scale
    scale_p = jnp.pad(scale, (0, Cp - C_out)).reshape(1, Cp)
    shift_p = jnp.pad(shift, (0, Cp - C_out)).reshape(1, Cp)

    # ---- pass 2: recompute conv tile + normalize + GELU, unpadded output ----
    out_flat = pl.pallas_call(
        _conv_bn_gelu_kernel,
        grid=(grid_m,),
        in_specs=[
            pl.BlockSpec((tm, K), lambda i: (i, 0)),
            pl.BlockSpec((K, Cp), lambda i: (0, 0)),
            pl.BlockSpec((1, Cp), lambda i: (0, 0)),
            pl.BlockSpec((1, Cp), lambda i: (0, 0)),
        ],
        out_specs=pl.BlockSpec((tm, C_out), lambda i: (i, 0)),
        out_shape=jax.ShapeDtypeStruct((M_pad, C_out), x_nchw.dtype),
        compiler_params=cparams,
    )(lhs, w_mat, scale_p, shift_p)

    out = out_flat[:M].reshape(N, H_out, W_out, C_out)
    return jnp.transpose(out, (0, 3, 1, 2))           # back to NCHW


def _reference(x, weight, gamma, beta, stride, padding, dilation, eps=1e-5,
               conv_operand_dtype=jnp.float32):
    """Pure-JAX reference (same semantics) for a correctness check."""
    xw = x.astype(conv_operand_dtype).astype(jnp.float32)
    ww = weight.astype(conv_operand_dtype).astype(jnp.float32)
    y = lax.conv_general_dilated(
        xw, ww, window_strides=(stride, stride),
        padding=[(padding, padding), (padding, padding)],
        rhs_dilation=(dilation, dilation),
        dimension_numbers=("NCHW", "OIHW", "NCHW"))
    mean = jnp.mean(y, axis=(0, 2, 3), keepdims=True)
    var = jnp.mean((y - mean) ** 2, axis=(0, 2, 3), keepdims=True)
    yhat = (y - mean) / jnp.sqrt(var + eps)
    y = yhat * gamma.reshape(1, -1, 1, 1) + beta.reshape(1, -1, 1, 1)
    return jax.nn.gelu(y, approximate=False)


if __name__ == "__main__":
    # Small shapes consistent with the module: N=2, c_in=4, c_out=8, 16x16 spatial,
    # kernel_size=3, stride=1, padding=1, dilation=1.  (M = 512.)
    N, C_in, C_out, H, W = 2, 4, 8, 16, 16
    KH = KW = 3
    stride, padding, dilation = 1, 1, 1

    key = jax.random.PRNGKey(0)
    kx, kw, kg, kb = jax.random.split(key, 4)
    x = jax.random.normal(kx, (N, C_in, H, W), jnp.float32)
    fan_in = C_in * KH * KW
    weight = jax.random.normal(kw, (C_out, C_in, KH, KW), jnp.float32) / math.sqrt(fan_in)
    gamma = 1.0 + 0.1 * jax.random.normal(kg, (C_out,), jnp.float32)
    beta = 0.1 * jax.random.normal(kb, (C_out,), jnp.float32)

    out = conv_bn_gelu(x, weight, gamma, beta,
                       stride=stride, padding=padding, dilation=dilation)
    out = jax.block_until_ready(out)
    assert out.shape == (N, C_out, H, W), out.shape

    # Tight check against a reference that matches the kernel's intentional
    # bf16 MXU operands (isolates conv/BN/GELU structure from the operand cast).
    ref_bf16 = _reference(x, weight, gamma, beta, stride, padding, dilation,
                          conv_operand_dtype=jnp.bfloat16)
    err_tight = float(jnp.max(jnp.abs(out - ref_bf16)))
    assert err_tight < 2e-3, err_tight

    # Loose sanity check against the pure-f32 reference; the gap is bf16 input
    # rounding only (BN re-normalization absorbs most of it).
    ref_f32 = _reference(x, weight, gamma, beta, stride, padding, dilation)
    err_f32 = float(jnp.max(jnp.abs(out - ref_f32)))
    assert err_f32 < 7.5e-2, err_f32

    print("KERNEL_OK")
</pallas_src>

<mosaic_0001>
module attributes {stable_mosaic.version = 11 : i64} {
  func.func @_conv_stats_kernel(%arg0: i32, %arg1: memref<64x36xbf16, #tpu.memory_space<vmem>>, %arg2: memref<36x128xbf16, #tpu.memory_space<vmem>>, %arg3: memref<1x2x128xf32, #tpu.memory_space<vmem>>) attributes {dimension_semantics = [#tpu.dimension_semantics<parallel>], iteration_bounds = array<i64: 8>, scalar_prefetch = 0 : i64, scratch_operands = 0 : i64, tpu.core_type = #tpu.core_type<tc>, window_params = [{transform_indices = @transform_0, window_bounds = array<i64: 64, 36>}, {pipeline_mode = #tpu.pipeline_mode<synchronous>, transform_indices = @transform_1, window_bounds = array<i64: 36, 128>}, {transform_indices = @transform_2, window_bounds = array<i64: 1, 2, 128>}]} {
    %c0 = arith.constant 0 : index
    %c0_0 = arith.constant 0 : index
    %0 = vector.load %arg1[%c0, %c0_0] : memref<64x36xbf16, #tpu.memory_space<vmem>>, vector<64x36xbf16>
    %c0_1 = arith.constant 0 : index
    %c0_2 = arith.constant 0 : index
    %1 = vector.load %arg2[%c0_1, %c0_2] : memref<36x128xbf16, #tpu.memory_space<vmem>>, vector<36x128xbf16>
    %cst = arith.constant dense<0.000000e+00> : vector<64x128xf32>
    %2 = tpu.matmul %0, %1, %cst {dimension_numbers = #tpu.dot_dimension_numbers<[1], [0], [0], [1], [0, 0, 1, 1], [], []>} : vector<64x36xbf16>, vector<36x128xbf16>, vector<64x128xf32> -> vector<64x128xf32>
    %cst_3 = arith.constant dense<0.000000e+00> : vector<128xf32>
    %3 = vector.multi_reduction <add>, %2, %cst_3 [0] : vector<64x128xf32> to vector<128xf32>
    %4 = vector.shape_cast %3 : vector<128xf32> to vector<1x128xf32>
    %c0_4 = arith.constant 0 : index
    %c0_5 = arith.constant 0 : index
    %c0_6 = arith.constant 0 : index
    %5 = vector.load %arg3[%c0_4, %c0_5, %c0_6] : memref<1x2x128xf32, #tpu.memory_space<vmem>>, vector<1x1x128xf32>
    %6 = vector.shape_cast %5 : vector<1x1x128xf32> to vector<1x128xf32>
    %7 = vector.shape_cast %4 : vector<1x128xf32> to vector<1x1x128xf32>
    tpu.vector_store %arg3[%c0_4, %c0_5, %c0_6], %7 {strides = array<i32>} : memref<1x2x128xf32, #tpu.memory_space<vmem>>, vector<1x1x128xf32>,
    %8 = arith.mulf %2, %2 : vector<64x128xf32>
    %cst_7 = arith.constant dense<0.000000e+00> : vector<128xf32>
    %9 = vector.multi_reduction <add>, %8, %cst_7 [0] : vector<64x128xf32> to vector<128xf32>
    %10 = vector.shape_cast %9 : vector<128xf32> to vector<1x128xf32>
    %c0_8 = arith.constant 0 : index
    %c1 = arith.constant 1 : index
    %c0_9 = arith.constant 0 : index
    %11 = vector.load %arg3[%c0_8, %c1, %c0_9] : memref<1x2x128xf32, #tpu.memory_space<vmem>>, vector<1x1x128xf32>
    %12 = vector.shape_cast %11 : vector<1x1x128xf32> to vector<1x128xf32>
    %13 = vector.shape_cast %10 : vector<1x128xf32> to vector<1x1x128xf32>
    tpu.vector_store %arg3[%c0_8, %c1, %c0_9], %13 {strides = array<i32>} : memref<1x2x128xf32, #tpu.memory_space<vmem>>, vector<1x1x128xf32>,
    return
  }
  func.func @transform_0(%arg0: i32) -> (i32, i32) {
    %c0_i32 = arith.constant 0 : i32
    %c0_i32_0 = arith.constant 0 : i32
    return %arg0, %c0_i32 : i32, i32
  }
  func.func @transform_1(%arg0: i32) -> (i32, i32) {
    %c0_i32 = arith.constant 0 : i32
    %c0_i32_0 = arith.constant 0 : i32
    %c0_i32_1 = arith.constant 0 : i32
    return %c0_i32, %c0_i32_0 : i32, i32
  }
  func.func @transform_2(%arg0: i32) -> (i32, i32, i32) {
    %c0_i32 = arith.constant 0 : i32
    %c0_i32_0 = arith.constant 0 : i32
    %c0_i32_1 = arith.constant 0 : i32
    return %arg0, %c0_i32, %c0_i32_0 : i32, i32, i32
  }
}

</mosaic_0001>

<llo_original>
// kernel: tpu_custom_call.1
$region0: #{tpu_custom_call.1}
  #allocation0 [shape = 'u32[]', space=smem, size = 0x4, offset = 0x4, fixed_abs, tag = 'smem constant byte address 0x4 - core index']
  #allocation1 [shape = 'u32[72,128]{1,0:T(1,128)}', space=vmem, size = 0x9000, scoped, tag = 'internal scratch']
  %s0 = inlined_call_operand.vmem [shape: bf16[512,36], index: 0, kind: input, shape index: {}]
  %s1 = inlined_call_operand.vmem [shape: bf16[36,128], index: 1, kind: input, shape index: {}]
  %s2 = inlined_call_operand.hbm [shape: f32[8,2,128], index: 2, kind: output, shape index: {}]
  %s3 = sld [smem:[#allocation0]]
  $region41: #{tpu_custom_call.1} parent=0
    _
  %s5 = ssub.s32 1, %s3
  %s6 = scalar_select 0, %s5, %s3
  $region1: #{tpu_custom_call.1} parent=0
    #allocation2 [shape = 'u8[2048]{0}', space=vmem, size = 0x800, scoped, tag = 'output window, operand 0']
    #allocation3 [shape = 's32[2]{0}', space=sflag, size = 0x8, scoped, tag = 'scoped memory for tpu_custom_call.1']
    %7 = vsyncpa [#allocation3], 0
    %s8 = scalar_lea.sflag [#allocation3], 1
    %9 = vsyncpa %s8, 0
    loop: start=0, step=1, limit=10
    $region2: #{tpu_custom_call.1} parent=1 // loop_pre_header
      _
    $region3: #{tpu_custom_call.1} parent=1 // loop_header
      %s11 = sphi 0, %s15
      %p12 = scmp.ge.s32.totalorder %s11, 10
      %s21 = sphi 0, %s23
      %s24 = sphi 0, %s21
      %s25 = sphi 0, %s24
      %s41 = sphi 0, %s25
      %s45 = sphi 0, %s45
      %s47 = sphi 0, %s45
      %s48 = sphi 0, %s47
      %s62 = sphi 0, %s48
      %s68 = sphi 0, %s70
      %s71 = sphi 0, %s68
      %s72 = sphi 0, %s71
      %s88 = sphi 0, %s72
    $region4: #{tpu_custom_call.1} parent=1 // loop_header_branch
      %14 = sbr.rel (%p12) target = $region8
    $region5: #{tpu_custom_call.1} parent=1 // loop_body
      %s16 = ssub.s32 %s11, 1
      %s17 = ssub.s32 %s11, 2
      %s18 = sadd.s32 %s11, 1
      %s19 = ssub.s32 %s11, %s18
      %p20 = scmp.eq.s32.totalorder %s19, 0
      %s22 = sadd.s32 %s21, 1
      %s23 = scalar_select %p20, %s21, %s22
      %p26 = pneg %p20
      %p27 = scmp.eq.s32.totalorder %s11, 7
      %p28 = por %p26, %p27
      %p29 = scmp.ne.s32.totalorder %s21, %s24
      %p30 = scmp.eq.s32.totalorder %s11, 0
      %p31 = por %p29, %p30
      %p32 = scmp.ne.s32.totalorder %s21, %s24
      %p33 = scmp.eq.s32.totalorder %s16, 7
      %p34 = por %p32, %p33
      %p35 = scmp.ne.s32.totalorder %s24, %s25
      %p36 = scmp.eq.s32.totalorder %s16, 0
      %p37 = por %p35, %p36
      %p38 = scmp.ne.s32.totalorder %s24, %s25
      %p39 = scmp.eq.s32.totalorder %s17, 7
      %p40 = por %p38, %p39
      %p42 = scmp.ne.s32.totalorder %s25, %s41
      %p43 = scmp.eq.s32.totalorder %s17, 0
      %p44 = por %p42, %p43
      %s46 = sadd.s32 %s45, 1
      %p49 = scmp.eq.s32.totalorder %s11, 7
      %p50 = scmp.ne.s32.totalorder %s45, %s47
      %p51 = scmp.eq.s32.totalorder %s11, 0
      %p52 = por %p50, %p51
      %p53 = scmp.ne.s32.totalorder %s45, %s47
      %p54 = scmp.eq.s32.totalorder %s16, 7
      %p55 = por %p53, %p54
      %p56 = scmp.ne.s32.totalorder %s47, %s48
      %p57 = scmp.eq.s32.totalorder %s16, 0
      %p58 = por %p56, %p57
      %p59 = scmp.ne.s32.totalorder %s47, %s48
      %p60 = scmp.eq.s32.totalorder %s17, 7
      %p61 = por %p59, %p60
      %p63 = scmp.ne.s32.totalorder %s48, %s62
      %p64 = scmp.eq.s32.totalorder %s17, 0
      %p65 = por %p63, %p64
      %s66 = ssub.s32 %s11, %s18
      %p67 = scmp.eq.s32.totalorder %s66, 0
      %s69 = sadd.s32 %s68, 1
      %s70 = scalar_select %p67, %s68, %s69
      %p73 = pneg %p67
      %p74 = scmp.eq.s32.totalorder %s11, 7
      %p75 = por %p73, %p74
      %p76 = scmp.ne.s32.totalorder %s68, %s71
      %p77 = scmp.eq.s32.totalorder %s11, 0
      %p78 = por %p76, %p77
      %p79 = scmp.ne.s32.totalorder %s68, %s71
      %p80 = scmp.eq.s32.totalorder %s16, 7
      %p81 = por %p79, %p80
      %p82 = scmp.ne.s32.totalorder %s71, %s72
      %p83 = scmp.eq.s32.totalorder %s16, 0
      %p84 = por %p82, %p83
      %p85 = scmp.ne.s32.totalorder %s71, %s72
      %p86 = scmp.eq.s32.totalorder %s17, 7
      %p87 = por %p85, %p86
      %p89 = scmp.ne.s32.totalorder %s72, %s88
      %p90 = scmp.eq.s32.totalorder %s17, 0
      %p91 = por %p89, %p90
      %p92 = scmp.le.s32.totalorder 1, %s11
      %p93 = scmp.lt.s32.totalorder %s11, 9
      %p94 = pnand %p92, %p93
      %p95 = pneg %p94
      // Predicated region
      $region9: #{tpu_custom_call.1} parent=5 // pred_check
        _
      $region10: #{tpu_custom_call.1} parent=5 // pred_check_branch
        %97 = sbr.rel (%p94) target = $region12
      $region11: #{tpu_custom_call.1} parent=5 // pred_region
        %s98 = ssub.s32 %s11, 1
        // Predicated region
        $region13: #{tpu_custom_call.1} parent=11 // pred_check
          %p99 = pneg %p58
        $region14: #{tpu_custom_call.1} parent=11 // pred_check_branch
          %101 = sbr.rel (%p99) target = $region16
        $region15: #{tpu_custom_call.1} parent=11 // pred_region
          _
        $region16: #{tpu_custom_call.1} parent=11 // pred_fallthru
          _
      $region12: #{tpu_custom_call.1} parent=5 // pred_fallthru
        _
      %p102 = scmp.lt.s32.totalorder %s11, 8
      // Predicated region
      $region17: #{tpu_custom_call.1} parent=5 // pred_check
        %p103 = pneg %p102
      $region18: #{tpu_custom_call.1} parent=5 // pred_check_branch
        %105 = sbr.rel (%p103) target = $region20
      $region19: #{tpu_custom_call.1} parent=5 // pred_region
        // Predicated region
        $region21: #{tpu_custom_call.1} parent=19 // pred_check
          %p106 = pneg %p31
        $region22: #{tpu_custom_call.1} parent=19 // pred_check_branch
          %108 = sbr.rel (%p106) target = $region24
        $region23: #{tpu_custom_call.1} parent=19 // pred_region
          %s109 = smul.u32 8, %s11
          %p110 = scmp.lt.s32.totalorder %s109, 63
          %s111 = scalar_select %p110, %s109, 63
          %s112 = smul.addr %s111, 4
          %s113 = scalar_lea.vmem %s0, %s112
          %s114 = smul.u32 8, %s11
        $region24: #{tpu_custom_call.1} parent=19 // pred_fallthru
          _
      $region20: #{tpu_custom_call.1} parent=5 // pred_fallthru
        _
      %p115 = scmp.le.s32.totalorder 1, %s11
      %p116 = scmp.lt.s32.totalorder %s11, 9
      %p117 = pnand %p115, %p116
      %p118 = pneg %p117
      // Predicated region
      $region25: #{tpu_custom_call.1} parent=5 // pred_check
        _
      $region26: #{tpu_custom_call.1} parent=5 // pred_check_branch
        %120 = sbr.rel (%p117) target = $region28
      $region27: #{tpu_custom_call.1} parent=5 // pred_region
        %s121 = ssub.s32 %s11, 1
        %s122 = smul.u32 8, %s16
        %p123 = scmp.lt.s32.totalorder %s122, 63
        %s124 = scalar_select %p123, %s122, 63
        %s125 = smul.addr %s124, 4
        %s126 = scalar_lea.vmem %s0, %s125
        %p127 = pneg %p37
        %p128 = pneg %p34
        %p129 = pneg %p58
        %p130 = pneg %p55
        %p131 = pneg %p84
        %p132 = pneg %p81
        %s133 = sand.u32 %s71, 1
        %s134 = scalar_lea.sflag [#allocation3], %s133
        %s135 = sand.u32 %s71, 1
        %s136 = smul.addr %s135, 2
        %s137 = scalar_lea.vmem [#allocation2], %s136
        %s138 = smul.u32 8, %s16
        %p139 = scmp.lt.s32.totalorder %s138, 63
        %s140 = scalar_select %p139, %s138, 63
        %s141 = smul.addr %s140, 4
        %s142 = scalar_lea.vmem %s0, %s141
        %s143 = smul.u32 8, %s16
        %v145 = vld [vmem:[%s142] sm:$0xf]
        %v146 = vld [vmem:[%s142 + $0x4] sm:$0xf]
        %v147 = vld [vmem:[%s142 + $0x8] sm:$0xf]
        %v148 = vld [vmem:[%s142 + $0xc] sm:$0xf]
        %v149 = vld [vmem:[%s142 + $0x10] sm:$0xf]
        %v150 = vld [vmem:[%s142 + $0x14] sm:$0xf]
        %v151 = vld [vmem:[%s142 + $0x18] sm:$0xf]
        %v152 = vld [vmem:[%s142 + $0x1c] sm:$0xf]
        %v153 = vld [vmem:[%s1] sm:$0xf]
        %v154 = vld [vmem:[%s1 + $0x4] sm:$0xf]
        %v155 = vld [vmem:[%s1 + $0x8] sm:$0xf]
        %v156 = vld [vmem:[%s1 + $0xc] sm:$0xf]
        %v157 = vld [vmem:[%s1 + $0x10] sm:$0x3]
        %v166 = vunpack.c.l.b16 %v145
        %v167 = vunpack.c.l.b16 %v146
        %v168 = vunpack.c.l.b16 %v147
        %v169 = vunpack.c.l.b16 %v148
        %v170 = vunpack.c.l.b16 %v149
        %v171 = vunpack.c.l.b16 %v150
        %v172 = vunpack.c.l.b16 %v151
        %v173 = vunpack.c.l.b16 %v152
        %v174 = vpack.c.b16 %v167, %v166
        %v175 = vpack.c.b16 %v169, %v168
        %v176 = vpack.c.b16 %v171, %v170
        %v177 = vpack.c.b16 %v173, %v172
        %v183 = vunpack.c.l.b16 %v153
        %v184 = vunpack.c.l.b16 %v154
        %v185 = vunpack.c.l.b16 %v155
        %v186 = vunpack.c.l.b16 %v156
        %v187 = vunpack.c.l.b16 %v157
        %v188 = vpack.c.b16 %v184, %v183
        %v189 = vpack.c.b16 %v186, %v185
        %v190 = vpack.c.b16 %v187, %v187
        %vm193 = vcmask 293888
        %v195 = vsel %vm193, %v174, 0
        %v198 = vsel %vm193, %v175, 0
        %v201 = vsel %vm193, %v176, 0
        %v204 = vsel %vm193, %v177, 0
        %vm206 = vcmask 1041408
        %v208 = vsel %vm206, %v190, 0
        %210 = vmatpush.bf16.msra.mxu0 0
        %211 = vmatpush.bf16.msra.mxu0 0
        %212 = vmatpush.bf16.msra.mxu0 0
        %213 = vmatpush.bf16.msra.mxu0 0
        %214 = vmatpush.bf16.msra.mxu0 0
        %215 = vmatpush.bf16.msra.mxu0 %v208
        %216 = vmatpush.bf16.msra.mxu0 %v189
        %217 = vmatpush.bf16.msra.mxu0 %v188
        %218 = vmatmul.bf16.gmra.mxu0 %v195
        %v219 = vpop.f32.mrf.mxu0
        %v220 = vadd.f32 0.0, %v219
        %v221 = vpop.f32.mrf.mxu0
        %v222 = vadd.f32 0.0, %v221
        %223 = vmatmul.bf16.gmra.mxu0 %v198
        %v224 = vpop.f32.mrf.mxu0
        %v225 = vadd.f32 0.0, %v224
        %v226 = vpop.f32.mrf.mxu0
        %v227 = vadd.f32 0.0, %v226
        %228 = vmatmul.bf16.gmra.mxu0 %v201
        %v229 = vpop.f32.mrf.mxu0
        %v230 = vadd.f32 0.0, %v229
        %v231 = vpop.f32.mrf.mxu0
        %v232 = vadd.f32 0.0, %v231
        %233 = vmatmul.bf16.gmra.mxu0 %v204
        %v234 = vpop.f32.mrf.mxu0
        %v235 = vadd.f32 0.0, %v234
        %v236 = vpop.f32.mrf.mxu0
        %v237 = vadd.f32 0.0, %v236
        %238 = vdwg.mxu0
        %v239 = vadd.f32 %v220, %v222
        %v240 = vadd.f32 %v239, %v225
        %v241 = vadd.f32 %v240, %v227
        %v242 = vadd.f32 %v241, %v230
        %v243 = vadd.f32 %v242, %v232
        %v244 = vadd.f32 %v243, %v235
        %v245 = vadd.f32 %v244, %v237
        %v246 = vrot.slane %v245, 4
        %v247 = vadd.f32 %v245, %v246
        %v248 = vrot.slane %v247, 2
        %v249 = vadd.f32 %v247, %v248
        %v250 = vrot.slane %v249, 1
        %v251 = vadd.f32 %v249, %v250
        %252 = vst [vmem:[%s137] sm:$0x1] %v251
        %v253 = vmul.f32 %v220, %v220
        %v254 = vmul.f32 %v222, %v222
        %v255 = vmul.f32 %v225, %v225
        %v256 = vmul.f32 %v227, %v227
        %v257 = vmul.f32 %v230, %v230
        %v258 = vmul.f32 %v232, %v232
        %v259 = vmul.f32 %v235, %v235
        %v260 = vmul.f32 %v237, %v237
        %v261 = vadd.f32 %v253, %v254
        %v262 = vadd.f32 %v261, %v255
        %v263 = vadd.f32 %v262, %v256
        %v264 = vadd.f32 %v263, %v257
        %v265 = vadd.f32 %v264, %v258
        %v266 = vadd.f32 %v265, %v259
        %v267 = vadd.f32 %v266, %v260
        %v268 = vrot.slane %v267, 4
        %v269 = vadd.f32 %v267, %v268
        %v270 = vrot.slane %v269, 2
        %v271 = vadd.f32 %v269, %v270
        %v272 = vrot.slane %v271, 1
        %v273 = vadd.f32 %v271, %v272
        %274 = vst [vmem:[%s137 + $0x1] sm:$0x1] %v273
        %s275 = sand.u32 %s71, 1
        %s276 = scalar_lea.sflag [#allocation3], %s275
        %s277 = sand.u32 %s71, 1
        %s278 = smul.addr %s277, 2
        %s279 = scalar_lea.vmem [#allocation2], %s278
        // Predicated region
        $region29: #{tpu_custom_call.1} parent=27 // pred_check
          %p280 = pneg %p81
        $region30: #{tpu_custom_call.1} parent=27 // pred_check_branch
          %282 = sbr.rel (%p280) target = $region32
        $region31: #{tpu_custom_call.1} parent=27 // pred_region
          %284 = vsyncadd %s276, 0
          %s285 = smul.addr %s16, 2
          %s286 = scalar_lea.hbm %s2, %s285
          %s288 = sshll.u32 %s279, 4
          %s289 = int_to_ptr.vmem [resolvable:$true] %s288
          %s290 = sshll.u32 %s286, 4
          %s291 = int_to_ptr.hbm [resolvable:$true] %s290
          %293 = dma.vmem_to_hbm [thread:$0]  %s289, 32, %s291, %s276
        $region32: #{tpu_custom_call.1} parent=27 // pred_fallthru
          _
      $region28: #{tpu_custom_call.1} parent=5 // pred_fallthru
        _
      %p294 = scmp.le.s32.totalorder 2, %s11
      // Predicated region
      $region33: #{tpu_custom_call.1} parent=5 // pred_check
        %p295 = pneg %p294
      $region34: #{tpu_custom_call.1} parent=5 // pred_check_branch
        %297 = sbr.rel (%p295) target = $region36
      $region35: #{tpu_custom_call.1} parent=5 // pred_region
        %s298 = ssub.s32 %s11, 2
        // Predicated region
        $region37: #{tpu_custom_call.1} parent=35 // pred_check
          %p299 = pneg %p87
        $region38: #{tpu_custom_call.1} parent=35 // pred_check_branch
          %301 = sbr.rel (%p299) target = $region40
        $region39: #{tpu_custom_call.1} parent=35 // pred_region
          %s302 = sand.u32 %s72, 1
          %s303 = scalar_lea.sflag [#allocation3], %s302
          %s304 = sand.u32 %s72, 1
          %s305 = smul.addr %s304, 2
          %s306 = scalar_lea.vmem [#allocation2], %s305
          %308 = dma.done %s303, 32
        $region40: #{tpu_custom_call.1} parent=35 // pred_fallthru
          _
      $region36: #{tpu_custom_call.1} parent=5 // pred_fallthru
        _
    $region6: #{tpu_custom_call.1} parent=1 // loop_footer
      %s15 = sadd.s32 1, %s11
    $region7: #{tpu_custom_call.1} parent=1 // loop_footer_branch
      %10 = sbr.rel target = $region3
    $region8: #{tpu_custom_call.1} parent=1 // loop_exit
      _
    %309 = vsyncpa [#allocation3], 1
    %s310 = scalar_lea.sflag [#allocation3], 1
    %311 = vsyncpa %s310, 1

</llo_original>
